<compile_context>
chip_gen: v6e
topology: v6e:2x2x1
jax: 0.10.0
libtpu: 0.0.40
codegen_flags: <defaults>
</compile_context>

<pallas_src>
import functools
import math

import jax
import jax.numpy as jnp
from jax.experimental import pallas as pl
from jax.experimental.pallas import tpu as pltpu


# ---------------------------------------------------------------------------
# Parameter slab layout: one resident (64, 128) f32 array (32 KiB).
# MXU LHS tiles at lane offset 0 on 16-row-aligned blocks; broadcast vectors
# live in columns >= 16 of the first row block.
# ---------------------------------------------------------------------------
_R_WE2 = 0     # rows  0:10, cols 0:10   encoder Linear(10,10) weight
_R_M   = 16    # rows 16:26, cols 0:10   fused bottleneck M = W_d1 @ W_e3
_R_WD2 = 32    # rows 32:42, cols 0:10   decoder Linear(10,10) weight
_R_WD3 = 48    # rows 48:50, cols 0:10   decoder Linear(10,2) weight (2,10)

_C_WE1 = 16    # rows 0:10, cols 16:18   encoder Linear(2,10) weight (10,2)
_C_BE1 = 18    # rows 0:10, col 18       encoder bias 1
_C_BE2 = 19    # rows 0:10, col 19       encoder bias 2
_C_BM  = 20    # rows 0:10, col 20       fused bottleneck bias W_d1*b_e3 + b_d1
_C_BD2 = 21    # rows 0:10, col 21       decoder bias 2
_C_BD3 = 22    # rows 0:2,  col 22       decoder bias 3 (2,)


def ae_kernel(x_ref, p_ref, out_ref):
    # x_ref: (2, bm) f32 -- batch on the lane axis (lane-dense).
    x0 = x_ref[0:1, :]                                    # (1, bm)
    x1 = x_ref[1:2, :]                                    # (1, bm)

    # Resident parameter slab (static sub-slices of a (64, 128) VMEM ref).
    we1_0 = p_ref[0:10, _C_WE1:_C_WE1 + 1]                # (10, 1)
    we1_1 = p_ref[0:10, _C_WE1 + 1:_C_WE1 + 2]            # (10, 1)
    be1   = p_ref[0:10, _C_BE1:_C_BE1 + 1]                # (10, 1)
    we2   = p_ref[_R_WE2:_R_WE2 + 10, 0:10]               # (10, 10)
    be2   = p_ref[0:10, _C_BE2:_C_BE2 + 1]                # (10, 1)
    m     = p_ref[_R_M:_R_M + 10, 0:10]                   # (10, 10) fused rank-1
    bmid  = p_ref[0:10, _C_BM:_C_BM + 1]                  # (10, 1)
    wd2   = p_ref[_R_WD2:_R_WD2 + 10, 0:10]               # (10, 10)
    bd2   = p_ref[0:10, _C_BD2:_C_BD2 + 1]                # (10, 1)
    wd3   = p_ref[_R_WD3:_R_WD3 + 2, 0:10]                # ( 2, 10)
    bd3   = p_ref[0:2, _C_BD3:_C_BD3 + 1]                 # ( 2, 1)

    # ----- encoder -----
    # Linear(2,10): K=2 -> two broadcast FMAs on the VPU (no MXU push).
    h = jnp.tanh(we1_0 * x0 + we1_1 * x1 + be1)                            # (10, bm)
    # Linear(10,10) on the MXU.
    h = jnp.tanh(jnp.dot(we2, h, preferred_element_type=jnp.float32) + be2)

    # ----- fused bottleneck: Linear(10,1) -> Linear(1,10) (no tanh between) -----
    # One rank-1 10x10 MXU matmul replaces sublane-reduce + broadcast + FMAs.
    h = jnp.tanh(jnp.dot(m, h, preferred_element_type=jnp.float32) + bmid)

    # ----- decoder -----
    h = jnp.tanh(jnp.dot(wd2, h, preferred_element_type=jnp.float32) + bd2)
    # Linear(10,2): (2,10) MXU matmul + a single lane-dense (2, bm) store.
    out_ref[...] = jnp.dot(wd3, h, preferred_element_type=jnp.float32) + bd3


def _round_up(x, m):
    return ((x + m - 1) // m) * m


@functools.partial(jax.jit, static_argnames=("tm",))
def ae_forward_lane_dense(x_t, param_slab, tm=16384):
    """Lane-dense forward: x_t (2, N) f32 -> (2, N) f32. No transposes."""
    n = x_t.shape[1]
    # Batch tile: multiple of 128, clamped so tiny N is a single grid step.
    # Large N yields >=2 grid steps, which the "parallel" axis shards across
    # both TensorCores on v7x.
    bm = min(tm, _round_up(n, 128))
    n_pad = _round_up(n, bm)

    x_t = x_t.astype(jnp.float32)
    if n_pad != n:
        x_t = jnp.pad(x_t, ((0, 0), (0, n_pad - n)))      # fusable, only if ragged

    out_t = pl.pallas_call(
        ae_kernel,
        out_shape=jax.ShapeDtypeStruct((2, n_pad), jnp.float32),
        grid_spec=pltpu.PrefetchScalarGridSpec(
            num_scalar_prefetch=0,
            grid=(n_pad // bm,),
            in_specs=[
                pl.BlockSpec((2, bm), lambda i: (0, i)),      # input tile
                pl.BlockSpec((64, 128), lambda i: (0, 0)),    # resident weights
            ],
            out_specs=pl.BlockSpec((2, bm), lambda i: (0, i)),
        ),
        compiler_params=pltpu.CompilerParams(
            dimension_semantics=("parallel",),
            vmem_limit_bytes=48 * 1024 * 1024,
        ),
    )(x_t, param_slab)

    return out_t[:, :n]


@functools.partial(jax.jit, static_argnames=("tm",))
def ae_forward(x, param_slab, tm=16384):
    """Torch-semantics forward: x (N, 2) -> (N, 2). Transposes only at the boundary."""
    return ae_forward_lane_dense(x.T, param_slab, tm=tm).T


# ---------------------------------------------------------------------------
# Parameter construction (torch layout) + packing into the VMEM slab.
# ---------------------------------------------------------------------------
def init_params(key):
    """Mirror torch.nn.Linear default init: U(-1/sqrt(fan_in), 1/sqrt(fan_in))."""
    def linear(k, fan_in, fan_out):
        kw, kb = jax.random.split(k)
        bound = 1.0 / math.sqrt(fan_in)
        w = jax.random.uniform(kw, (fan_out, fan_in), jnp.float32, -bound, bound)
        b = jax.random.uniform(kb, (fan_out,), jnp.float32, -bound, bound)
        return w, b

    keys = jax.random.split(key, 6)
    p = {}
    p["W_e1"], p["b_e1"] = linear(keys[0], 2, 10)
    p["W_e2"], p["b_e2"] = linear(keys[1], 10, 10)
    p["W_e3"], p["b_e3"] = linear(keys[2], 10, 1)
    p["W_d1"], p["b_d1"] = linear(keys[3], 1, 10)
    p["W_d2"], p["b_d2"] = linear(keys[4], 10, 10)
    p["W_d3"], p["b_d3"] = linear(keys[5], 10, 2)
    return p


def pack_params(p):
    """Pack all parameters (incl. the fused bottleneck) into one (64,128) f32 slab."""
    # Rank-1 bottleneck fusion: Linear(10,1) -> Linear(1,10) with no tanh between.
    m_fused = p["W_d1"] @ p["W_e3"]                        # (10, 10)
    b_fused = p["W_d1"][:, 0] * p["b_e3"][0] + p["b_d1"]   # (10,)

    slab = jnp.zeros((64, 128), jnp.float32)
    slab = slab.at[_R_WE2:_R_WE2 + 10, 0:10].set(p["W_e2"])
    slab = slab.at[_R_M:_R_M + 10, 0:10].set(m_fused)
    slab = slab.at[_R_WD2:_R_WD2 + 10, 0:10].set(p["W_d2"])
    slab = slab.at[_R_WD3:_R_WD3 + 2, 0:10].set(p["W_d3"])
    slab = slab.at[0:10, _C_WE1:_C_WE1 + 2].set(p["W_e1"])
    slab = slab.at[0:10, _C_BE1].set(p["b_e1"])
    slab = slab.at[0:10, _C_BE2].set(p["b_e2"])
    slab = slab.at[0:10, _C_BM].set(b_fused)
    slab = slab.at[0:10, _C_BD2].set(p["b_d2"])
    slab = slab.at[0:2, _C_BD3].set(p["b_d3"])
    return slab


def ae_reference(x, p):
    """Pure-JAX reference matching the PyTorch forward (x @ W.T + b)."""
    h = jnp.tanh(x @ p["W_e1"].T + p["b_e1"])
    h = jnp.tanh(h @ p["W_e2"].T + p["b_e2"])
    z = h @ p["W_e3"].T + p["b_e3"]
    h = jnp.tanh(z @ p["W_d1"].T + p["b_d1"])
    h = jnp.tanh(h @ p["W_d2"].T + p["b_d2"])
    return h @ p["W_d3"].T + p["b_d3"]


if __name__ == "__main__":
    key = jax.random.PRNGKey(0)
    k_params, k_x1, k_x2 = jax.random.split(key, 3)

    params = init_params(k_params)
    slab = pack_params(params)

    # X = X.T in the original script => samples are rows of shape (N, 2).
    x_small = jax.random.normal(k_x1, (8, 2), jnp.float32)
    out_small = jax.block_until_ready(ae_forward(x_small, slab))
    ref_small = ae_reference(x_small, params)
    assert out_small.shape == (8, 2)
    assert jnp.allclose(out_small, ref_small, atol=5e-5, rtol=1e-4), \
        "mismatch vs reference (small batch)"

    # Ragged, multi-tile batch (small tm) to exercise the grid + padding path.
    x_big = jax.random.normal(k_x2, (300, 2), jnp.float32)
    out_big = jax.block_until_ready(ae_forward(x_big, slab, tm=128))
    ref_big = ae_reference(x_big, params)
    assert out_big.shape == (300, 2)
    assert jnp.allclose(out_big, ref_big, atol=5e-5, rtol=1e-4), \
        "mismatch vs reference (multi-tile batch)"

    # Lane-dense API (no wrapper transposes at all).
    out_ld = jax.block_until_ready(ae_forward_lane_dense(x_big.T, slab))
    assert out_ld.shape == (2, 300)
    assert jnp.allclose(out_ld.T, ref_big, atol=5e-5, rtol=1e-4), \
        "mismatch vs reference (lane-dense API)"

    print("KERNEL_OK")
</pallas_src>

<mosaic_0001>
module attributes {stable_mosaic.version = 11 : i64} {
  func.func @ae_kernel(%arg0: i32, %arg1: memref<2x128xf32, #tpu.memory_space<vmem>>, %arg2: memref<64x128xf32, #tpu.memory_space<vmem>>, %arg3: memref<2x128xf32, #tpu.memory_space<vmem>>) attributes {dimension_semantics = [#tpu.dimension_semantics<parallel>], iteration_bounds = array<i64: 1>, scalar_prefetch = 0 : i64, scratch_operands = 0 : i64, tpu.core_type = #tpu.core_type<tc>, window_params = [{transform_indices = @transform_0, window_bounds = array<i64: 2, 128>}, {pipeline_mode = #tpu.pipeline_mode<synchronous>, transform_indices = @transform_1, window_bounds = array<i64: 64, 128>}, {transform_indices = @transform_2, window_bounds = array<i64: 2, 128>}]} {
    %c0 = arith.constant 0 : index
    %c0_0 = arith.constant 0 : index
    %0 = vector.load %arg1[%c0, %c0_0] : memref<2x128xf32, #tpu.memory_space<vmem>>, vector<1x128xf32>
    %c1 = arith.constant 1 : index
    %c0_1 = arith.constant 0 : index
    %1 = vector.load %arg1[%c1, %c0_1] : memref<2x128xf32, #tpu.memory_space<vmem>>, vector<1x128xf32>
    %c0_2 = arith.constant 0 : index
    %c16 = arith.constant 16 : index
    %2 = vector.load %arg2[%c0_2, %c16] : memref<64x128xf32, #tpu.memory_space<vmem>>, vector<10x1xf32>
    %c0_3 = arith.constant 0 : index
    %c17 = arith.constant 17 : index
    %3 = vector.load %arg2[%c0_3, %c17] : memref<64x128xf32, #tpu.memory_space<vmem>>, vector<10x1xf32>
    %c0_4 = arith.constant 0 : index
    %c18 = arith.constant 18 : index
    %4 = vector.load %arg2[%c0_4, %c18] : memref<64x128xf32, #tpu.memory_space<vmem>>, vector<10x1xf32>
    %c0_5 = arith.constant 0 : index
    %c0_6 = arith.constant 0 : index
    %5 = vector.load %arg2[%c0_5, %c0_6] : memref<64x128xf32, #tpu.memory_space<vmem>>, vector<10x10xf32>
    %c0_7 = arith.constant 0 : index
    %c19 = arith.constant 19 : index
    %6 = vector.load %arg2[%c0_7, %c19] : memref<64x128xf32, #tpu.memory_space<vmem>>, vector<10x1xf32>
    %c16_8 = arith.constant 16 : index
    %c0_9 = arith.constant 0 : index
    %7 = vector.load %arg2[%c16_8, %c0_9] : memref<64x128xf32, #tpu.memory_space<vmem>>, vector<10x10xf32>
    %c0_10 = arith.constant 0 : index
    %c20 = arith.constant 20 : index
    %8 = vector.load %arg2[%c0_10, %c20] : memref<64x128xf32, #tpu.memory_space<vmem>>, vector<10x1xf32>
    %c32 = arith.constant 32 : index
    %c0_11 = arith.constant 0 : index
    %9 = vector.load %arg2[%c32, %c0_11] : memref<64x128xf32, #tpu.memory_space<vmem>>, vector<10x10xf32>
    %c0_12 = arith.constant 0 : index
    %c21 = arith.constant 21 : index
    %10 = vector.load %arg2[%c0_12, %c21] : memref<64x128xf32, #tpu.memory_space<vmem>>, vector<10x1xf32>
    %c48 = arith.constant 48 : index
    %c0_13 = arith.constant 0 : index
    %11 = vector.load %arg2[%c48, %c0_13] : memref<64x128xf32, #tpu.memory_space<vmem>>, vector<2x10xf32>
    %c0_14 = arith.constant 0 : index
    %c22 = arith.constant 22 : index
    %12 = vector.load %arg2[%c0_14, %c22] : memref<64x128xf32, #tpu.memory_space<vmem>>, vector<2x1xf32>
    %13 = vector.broadcast %2 : vector<10x1xf32> to vector<10x128xf32>
    %14 = vector.broadcast %0 : vector<1x128xf32> to vector<10x128xf32>
    %15 = arith.mulf %13, %14 : vector<10x128xf32>
    %16 = vector.broadcast %3 : vector<10x1xf32> to vector<10x128xf32>
    %17 = vector.broadcast %1 : vector<1x128xf32> to vector<10x128xf32>
    %18 = arith.mulf %16, %17 : vector<10x128xf32>
    %19 = arith.addf %15, %18 : vector<10x128xf32>
    %20 = vector.broadcast %4 : vector<10x1xf32> to vector<10x128xf32>
    %21 = arith.addf %19, %20 : vector<10x128xf32>
    %22 = math.tanh %21 : vector<10x128xf32>
    %cst = arith.constant dense<0.000000e+00> : vector<10x128xf32>
    %23 = tpu.matmul %5, %22, %cst {dimension_numbers = #tpu.dot_dimension_numbers<[1], [0], [0], [1], [0, 0, 1, 1], [], []>} : vector<10x10xf32>, vector<10x128xf32>, vector<10x128xf32> -> vector<10x128xf32>
    %24 = vector.broadcast %6 : vector<10x1xf32> to vector<10x128xf32>
    %25 = arith.addf %23, %24 : vector<10x128xf32>
    %26 = math.tanh %25 : vector<10x128xf32>
    %cst_15 = arith.constant dense<0.000000e+00> : vector<10x128xf32>
    %27 = tpu.matmul %7, %26, %cst_15 {dimension_numbers = #tpu.dot_dimension_numbers<[1], [0], [0], [1], [0, 0, 1, 1], [], []>} : vector<10x10xf32>, vector<10x128xf32>, vector<10x128xf32> -> vector<10x128xf32>
    %28 = vector.broadcast %8 : vector<10x1xf32> to vector<10x128xf32>
    %29 = arith.addf %27, %28 : vector<10x128xf32>
    %30 = math.tanh %29 : vector<10x128xf32>
    %cst_16 = arith.constant dense<0.000000e+00> : vector<10x128xf32>
    %31 = tpu.matmul %9, %30, %cst_16 {dimension_numbers = #tpu.dot_dimension_numbers<[1], [0], [0], [1], [0, 0, 1, 1], [], []>} : vector<10x10xf32>, vector<10x128xf32>, vector<10x128xf32> -> vector<10x128xf32>
    %32 = vector.broadcast %10 : vector<10x1xf32> to vector<10x128xf32>
    %33 = arith.addf %31, %32 : vector<10x128xf32>
    %34 = math.tanh %33 : vector<10x128xf32>
    %cst_17 = arith.constant dense<0.000000e+00> : vector<2x128xf32>
    %35 = tpu.matmul %11, %34, %cst_17 {dimension_numbers = #tpu.dot_dimension_numbers<[1], [0], [0], [1], [0, 0, 1, 1], [], []>} : vector<2x10xf32>, vector<10x128xf32>, vector<2x128xf32> -> vector<2x128xf32>
    %36 = vector.broadcast %12 : vector<2x1xf32> to vector<2x128xf32>
    %37 = arith.addf %35, %36 : vector<2x128xf32>
    %c0_18 = arith.constant 0 : index
    %c0_19 = arith.constant 0 : index
    %38 = vector.load %arg3[%c0_18, %c0_19] : memref<2x128xf32, #tpu.memory_space<vmem>>, vector<2x128xf32>
    tpu.vector_store %arg3[%c0_18, %c0_19], %37 {strides = array<i32>} : memref<2x128xf32, #tpu.memory_space<vmem>>, vector<2x128xf32>,
    return
  }
  func.func @transform_0(%arg0: i32) -> (i32, i32) {
    %c0_i32 = arith.constant 0 : i32
    %c0_i32_0 = arith.constant 0 : i32
    return %c0_i32, %arg0 : i32, i32
  }
  func.func @transform_1(%arg0: i32) -> (i32, i32) {
    %c0_i32 = arith.constant 0 : i32
    %c0_i32_0 = arith.constant 0 : i32
    %c0_i32_1 = arith.constant 0 : i32
    return %c0_i32, %c0_i32_0 : i32, i32
  }
  func.func @transform_2(%arg0: i32) -> (i32, i32) {
    %c0_i32 = arith.constant 0 : i32
    %c0_i32_0 = arith.constant 0 : i32
    return %c0_i32, %arg0 : i32, i32
  }
}

</mosaic_0001>

<llo_original>
// kernel: ae_forward_lane_dense.1
$region0: #{ae_forward_lane_dense.1}
  #allocation0 [shape = 'u32[]', space=smem, size = 0x4, offset = 0x4, fixed_abs, tag = 'smem constant byte address 0x4 - core index']
  #allocation1 [shape = 'u32[144,128]{1,0:T(1,128)}', space=vmem, size = 0x12000, scoped, tag = 'internal scratch']
  %s0 = inlined_call_operand.vmem [shape: f32[2,128], index: 0, kind: input, shape index: {}]
  %s1 = inlined_call_operand.hbm [shape: f32[64,128], index: 1, kind: input, shape index: {}]
  %s2 = inlined_call_operand.hbm [shape: f32[2,128], index: 2, kind: output, shape index: {}]
  %s3 = sld [smem:[#allocation0]]
  $region22: #{ae_forward_lane_dense.1} parent=0
    _
  %s5 = ssub.s32 1, %s3
  %s6 = scalar_select 0, %s5, %s3
  $region1: #{ae_forward_lane_dense.1} parent=0
    #allocation2 [shape = 'u8[32768]{0}', space=vmem, size = 0x8000, scoped, tag = 'input window, operand 1, single buffered']
    #allocation3 [shape = 's32[1]{0}', space=sflag, size = 0x4, scoped, tag = 'scoped memory for ae_forward_lane_dense.1']
    #allocation4 [shape = 's32[1]{0}', space=sflag, size = 0x4, scoped, tag = 'scoped memory for ae_forward_lane_dense.1']
    #allocation5 [shape = 'u8[1024]{0}', space=vmem, size = 0x400, scoped, tag = 'output window, operand 0, single buffered']
    %7 = vsyncpa [#allocation3], 0
    %8 = vsyncpa [#allocation4], 0
    // Predicated region
    $region2: #{ae_forward_lane_dense.1} parent=1 // pred_check
      _
    $region3: #{ae_forward_lane_dense.1} parent=1 // pred_check_branch
      %10 = sbr.rel (0) target = $region5
    $region4: #{ae_forward_lane_dense.1} parent=1 // pred_region
      _
    $region5: #{ae_forward_lane_dense.1} parent=1 // pred_fallthru
      _
    // Predicated region
    $region6: #{ae_forward_lane_dense.1} parent=1 // pred_check
      _
    $region7: #{ae_forward_lane_dense.1} parent=1 // pred_check_branch
      %12 = sbr.rel (0) target = $region9
    $region8: #{ae_forward_lane_dense.1} parent=1 // pred_region
      %s14 = ssub.s32 1024, 1024
      %15 = vsyncadd [#allocation3], %s14
      %s16 = sshll.u32 [#allocation2], 4
      %s17 = int_to_ptr.vmem [resolvable:$true] %s16
      %22 = dma.hbm_to_vmem [thread:$0]  %s1, 1024, %s17, [#allocation3], 128, 128, 8
    $region9: #{ae_forward_lane_dense.1} parent=1 // pred_fallthru
      _
    // Predicated region
    $region10: #{ae_forward_lane_dense.1} parent=1 // pred_check
      _
    $region11: #{ae_forward_lane_dense.1} parent=1 // pred_check_branch
      %24 = sbr.rel (0) target = $region13
    $region12: #{ae_forward_lane_dense.1} parent=1 // pred_region
      %25 = dma.done [#allocation3], 1024
    $region13: #{ae_forward_lane_dense.1} parent=1 // pred_fallthru
      _
    %v26 = vld [vmem:[%s0] sm:$0x1]
    %v27 = vld [vmem:[%s0 + $0x1] sm:$0x1]
    %v28 = vld [vmem:[#allocation2] sm:$0xff]
    %v29 = vld [vmem:[#allocation2 + $0x8] sm:$0x3]
    %v30 = vld [vmem:[#allocation2 + $0x10] sm:$0xff]
    %v31 = vld [vmem:[#allocation2 + $0x18] sm:$0x3]
    %v32 = vld [vmem:[#allocation2 + $0x20] sm:$0xff]
    %v33 = vld [vmem:[#allocation2 + $0x28] sm:$0x3]
    %v34 = vld [vmem:[#allocation2 + $0x30] sm:$0x3]
    %v35 = vld [vmem:[#allocation2] sm:$0x3]
    %37 = vset.pattern.permute.xlu0 16
    %38 = vperm.xlu0 %37, %v28
    %v39 = vpop.permute.xlu0 %38
    %42 = vset.pattern.permute.xlu0 16
    %43 = vperm.xlu0 %42, %v29
    %v44 = vpop.permute.xlu0 %43
    %v46 = vlaneseq
    %v47 = vshrl.u32 %v46, 7
    %v48 = vsub.s32 0, %v47
    %v49 = vrot.slane %v26, %v48
    %v50 = vmul.f32 %v39, %v49
    %v51 = vmul.f32 %v44, %v49
    %52 = vset.pattern.permute.xlu0 17
    %53 = vperm.xlu0 %52, %v28
    %v54 = vpop.permute.xlu0 %53
    %56 = vset.pattern.permute.xlu0 17
    %57 = vperm.xlu0 %56, %v29
    %v58 = vpop.permute.xlu0 %57
    %v60 = vlaneseq
    %v61 = vshrl.u32 %v60, 7
    %v62 = vsub.s32 0, %v61
    %v63 = vrot.slane %v27, %v62
    %v64 = vmul.f32 %v54, %v63
    %v65 = vmul.f32 %v58, %v63
    %v66 = vadd.f32 %v50, %v64
    %v67 = vadd.f32 %v51, %v65
    %68 = vset.pattern.permute.xlu0 18
    %69 = vperm.xlu0 %68, %v28
    %v70 = vpop.permute.xlu0 %69
    %72 = vset.pattern.permute.xlu0 18
    %73 = vperm.xlu0 %72, %v29
    %v74 = vpop.permute.xlu0 %73
    %v76 = vadd.f32 %v66, %v70
    %v77 = vadd.f32 %v67, %v74
    %v78 = vtanh.pop %v76
    %v79 = vtanh.pop %v77
    %80 = vset.pattern.permute.xlu0 19
    %81 = vperm.xlu0 %80, %v28
    %v82 = vpop.permute.xlu0 %81
    %84 = vset.pattern.permute.xlu0 19
    %85 = vperm.xlu0 %84, %v29
    %v86 = vpop.permute.xlu0 %85
    %vm88 = vcmask 80896
    %v89 = vsel %vm88, %v28, 0
    %v91 = vsel %vm88, %v29, 0
    %vm93 = vcmask 1041408
    %v95 = vsel %vm93, %v79, 0
    %97 = vmatprep.subr.mxu0 0.0
    %98 = vmatpush1.msra.mxu0 0.0
    %99 = vmatprep.subr.mxu0 0.0
    %100 = vmatpush1.msra.mxu0 0.0
    %101 = vmatprep.subr.mxu0 0.0
    %102 = vmatpush1.msra.mxu0 0.0
    %103 = vmatprep.subr.mxu0 0.0
    %104 = vmatpush1.msra.mxu0 0.0
    %105 = vmatprep.subr.mxu0 0.0
    %106 = vmatpush1.msra.mxu0 0.0
    %107 = vmatprep.subr.mxu0 0.0
    %108 = vmatpush1.msra.mxu0 0.0
    %109 = vmatprep.subr.mxu0 0.0
    %110 = vmatpush1.msra.mxu0 0.0
    %111 = vmatprep.subr.mxu0 0.0
    %112 = vmatpush1.msra.mxu0 0.0
    %113 = vmatprep.subr.mxu0 0.0
    %114 = vmatpush1.msra.mxu0 0.0
    %115 = vmatprep.subr.mxu0 0.0
    %116 = vmatpush1.msra.mxu0 0.0
    %117 = vmatprep.subr.mxu0 0.0
    %118 = vmatpush1.msra.mxu0 0.0
    %119 = vmatprep.subr.mxu0 0.0
    %120 = vmatpush1.msra.mxu0 0.0
    %121 = vmatprep.subr.mxu0 0.0
    %122 = vmatpush1.msra.mxu0 0.0
    %123 = vmatprep.subr.mxu0 0.0
    %124 = vmatpush1.msra.mxu0 0.0
    %125 = vmatprep.subr.mxu0 0.0
    %126 = vmatpush1.msra.mxu0 %v95
    %127 = vmatprep.subr.mxu0 0.0
    %128 = vmatpush1.msra.mxu0 %v78
    %129 = vmatprep.subr.mxu0 0.0
    %130 = vmatpush2.msra.mxu0 0.0
    %131 = vmatprep.subr.mxu0 0.0
    %132 = vmatpush2.msra.mxu0 0.0
    %133 = vmatprep.subr.mxu0 0.0
    %134 = vmatpush2.msra.mxu0 0.0
    %135 = vmatprep.subr.mxu0 0.0
    %136 = vmatpush2.msra.mxu0 0.0
    %137 = vmatprep.subr.mxu0 0.0
    %138 = vmatpush2.msra.mxu0 0.0
    %139 = vmatprep.subr.mxu0 0.0
    %140 = vmatpush2.msra.mxu0 0.0
    %141 = vmatprep.subr.mxu0 0.0
    %142 = vmatpush2.msra.mxu0 0.0
    %143 = vmatprep.subr.mxu0 0.0
    %144 = vmatpush2.msra.mxu0 0.0
    %145 = vmatprep.subr.mxu0 0.0
    %146 = vmatpush2.msra.mxu0 0.0
    %147 = vmatprep.subr.mxu0 0.0
    %148 = vmatpush2.msra.mxu0 0.0
    %149 = vmatprep.subr.mxu0 0.0
    %150 = vmatpush2.msra.mxu0 0.0
    %151 = vmatprep.subr.mxu0 0.0
    %152 = vmatpush2.msra.mxu0 0.0
    %153 = vmatprep.subr.mxu0 0.0
    %154 = vmatpush2.msra.mxu0 0.0
    %155 = vmatprep.subr.mxu0 0.0
    %156 = vmatpush2.msra.mxu0 0.0
    %157 = vmatprep.subr.mxu0 0.0
    %158 = vmatpush2.msra.mxu0 0.0
    %159 = vmatprep.subr.mxu0 0.0
    %160 = vmatpush2.msra.mxu0 0.0
    %161 = vmatprep.mubr.f32.mxu0 0.0
    %162 = vmatmul.mubr.f32.gmra.mxu0 %v89
    %v163 = vpop.f32.mrf.mxu0
    %v164 = vadd.f32 %v82, %v163
    %v165 = vpop.f32.mrf.mxu0
    %166 = vmatprep.mubr.f32.mxu0 0.0
    %167 = vmatmul.mubr.f32.gmra.mxu0 %v91
    %v168 = vpop.f32.mrf.mxu0
    %v169 = vadd.f32 %v86, %v168
    %v170 = vpop.f32.mrf.mxu0
    %171 = vdwg.mxu0
    %v172 = vtanh.pop %v164
    %v173 = vtanh.pop %v169
    %174 = vset.pattern.permute.xlu0 20
    %175 = vperm.xlu0 %174, %v28
    %v176 = vpop.permute.xlu0 %175
    %178 = vset.pattern.permute.xlu0 20
    %179 = vperm.xlu0 %178, %v29
    %v180 = vpop.permute.xlu0 %179
    %v183 = vsel %vm88, %v30, 0
    %v186 = vsel %vm88, %v31, 0
    %v189 = vsel %vm93, %v173, 0
    %191 = vmatprep.subr.mxu0 0.0
    %192 = vmatpush1.msra.mxu0 0.0
    %193 = vmatprep.subr.mxu0 0.0
    %194 = vmatpush1.msra.mxu0 0.0
    %195 = vmatprep.subr.mxu0 0.0
    %196 = vmatpush1.msra.mxu0 0.0
    %197 = vmatprep.subr.mxu0 0.0
    %198 = vmatpush1.msra.mxu0 0.0
    %199 = vmatprep.subr.mxu0 0.0
    %200 = vmatpush1.msra.mxu0 0.0
    %201 = vmatprep.subr.mxu0 0.0
    %202 = vmatpush1.msra.mxu0 0.0
    %203 = vmatprep.subr.mxu0 0.0
    %204 = vmatpush1.msra.mxu0 0.0
    %205 = vmatprep.subr.mxu0 0.0
    %206 = vmatpush1.msra.mxu0 0.0
    %207 = vmatprep.subr.mxu0 0.0
    %208 = vmatpush1.msra.mxu0 0.0
    %209 = vmatprep.subr.mxu0 0.0
    %210 = vmatpush1.msra.mxu0 0.0
    %211 = vmatprep.subr.mxu0 0.0
    %212 = vmatpush1.msra.mxu0 0.0
    %213 = vmatprep.subr.mxu0 0.0
    %214 = vmatpush1.msra.mxu0 0.0
    %215 = vmatprep.subr.mxu0 0.0
    %216 = vmatpush1.msra.mxu0 0.0
    %217 = vmatprep.subr.mxu0 0.0
    %218 = vmatpush1.msra.mxu0 0.0
    %219 = vmatprep.subr.mxu0 0.0
    %220 = vmatpush1.msra.mxu0 %v189
    %221 = vmatprep.subr.mxu0 0.0
    %222 = vmatpush1.msra.mxu0 %v172
    %223 = vmatprep.subr.mxu0 0.0
    %224 = vmatpush2.msra.mxu0 0.0
    %225 = vmatprep.subr.mxu0 0.0
    %226 = vmatpush2.msra.mxu0 0.0
    %227 = vmatprep.subr.mxu0 0.0
    %228 = vmatpush2.msra.mxu0 0.0
    %229 = vmatprep.subr.mxu0 0.0
    %230 = vmatpush2.msra.mxu0 0.0
    %231 = vmatprep.subr.mxu0 0.0
    %232 = vmatpush2.msra.mxu0 0.0
    %233 = vmatprep.subr.mxu0 0.0
    %234 = vmatpush2.msra.mxu0 0.0
    %235 = vmatprep.subr.mxu0 0.0
    %236 = vmatpush2.msra.mxu0 0.0
    %237 = vmatprep.subr.mxu0 0.0
    %238 = vmatpush2.msra.mxu0 0.0
    %239 = vmatprep.subr.mxu0 0.0
    %240 = vmatpush2.msra.mxu0 0.0
    %241 = vmatprep.subr.mxu0 0.0
    %242 = vmatpush2.msra.mxu0 0.0
    %243 = vmatprep.subr.mxu0 0.0
    %244 = vmatpush2.msra.mxu0 0.0
    %245 = vmatprep.subr.mxu0 0.0
    %246 = vmatpush2.msra.mxu0 0.0
    %247 = vmatprep.subr.mxu0 0.0
    %248 = vmatpush2.msra.mxu0 0.0
    %249 = vmatprep.subr.mxu0 0.0
    %250 = vmatpush2.msra.mxu0 0.0
    %251 = vmatprep.subr.mxu0 0.0
    %252 = vmatpush2.msra.mxu0 0.0
    %253 = vmatprep.subr.mxu0 0.0
    %254 = vmatpush2.msra.mxu0 0.0
    %255 = vmatprep.mubr.f32.mxu0 0.0
    %256 = vmatmul.mubr.f32.gmra.mxu0 %v183
    %v257 = vpop.f32.mrf.mxu0
    %v258 = vadd.f32 %v176, %v257
    %v259 = vpop.f32.mrf.mxu0
    %260 = vmatprep.mubr.f32.mxu0 0.0
    %261 = vmatmul.mubr.f32.gmra.mxu0 %v186
    %v262 = vpop.f32.mrf.mxu0
    %v263 = vadd.f32 %v180, %v262
    %v264 = vpop.f32.mrf.mxu0
    %265 = vdwg.mxu0
    %v266 = vtanh.pop %v258
    %v267 = vtanh.pop %v263
    %268 = vset.pattern.permute.xlu0 21
    %269 = vperm.xlu0 %268, %v28
    %v270 = vpop.permute.xlu0 %269
    %272 = vset.pattern.permute.xlu0 21
    %273 = vperm.xlu0 %272, %v29
    %v274 = vpop.permute.xlu0 %273
    %v277 = vsel %vm88, %v32, 0
    %v280 = vsel %vm88, %v33, 0
    %v283 = vsel %vm93, %v267, 0
    %285 = vmatprep.subr.mxu0 0.0
    %286 = vmatpush1.msra.mxu0 0.0
    %287 = vmatprep.subr.mxu0 0.0
    %288 = vmatpush1.msra.mxu0 0.0
    %289 = vmatprep.subr.mxu0 0.0
    %290 = vmatpush1.msra.mxu0 0.0
    %291 = vmatprep.subr.mxu0 0.0
    %292 = vmatpush1.msra.mxu0 0.0
    %293 = vmatprep.subr.mxu0 0.0
    %294 = vmatpush1.msra.mxu0 0.0
    %295 = vmatprep.subr.mxu0 0.0
    %296 = vmatpush1.msra.mxu0 0.0
    %297 = vmatprep.subr.mxu0 0.0
    %298 = vmatpush1.msra.mxu0 0.0
    %299 = vmatprep.subr.mxu0 0.0
    %300 = vmatpush1.msra.mxu0 0.0
    %301 = vmatprep.subr.mxu0 0.0
    %302 = vmatpush1.msra.mxu0 0.0
    %303 = vmatprep.subr.mxu0 0.0
    %304 = vmatpush1.msra.mxu0 0.0
    %305 = vmatprep.subr.mxu0 0.0
    %306 = vmatpush1.msra.mxu0 0.0
    %307 = vmatprep.subr.mxu0 0.0
    %308 = vmatpush1.msra.mxu0 0.0
    %309 = vmatprep.subr.mxu0 0.0
    %310 = vmatpush1.msra.mxu0 0.0
    %311 = vmatprep.subr.mxu0 0.0
    %312 = vmatpush1.msra.mxu0 0.0
    %313 = vmatprep.subr.mxu0 0.0
    %314 = vmatpush1.msra.mxu0 %v283
    %315 = vmatprep.subr.mxu0 0.0
    %316 = vmatpush1.msra.mxu0 %v266
    %317 = vmatprep.subr.mxu0 0.0
    %318 = vmatpush2.msra.mxu0 0.0
    %319 = vmatprep.subr.mxu0 0.0
    %320 = vmatpush2.msra.mxu0 0.0
    %321 = vmatprep.subr.mxu0 0.0
    %322 = vmatpush2.msra.mxu0 0.0
    %323 = vmatprep.subr.mxu0 0.0
    %324 = vmatpush2.msra.mxu0 0.0
    %325 = vmatprep.subr.mxu0 0.0
    %326 = vmatpush2.msra.mxu0 0.0
    %327 = vmatprep.subr.mxu0 0.0
    %328 = vmatpush2.msra.mxu0 0.0
    %329 = vmatprep.subr.mxu0 0.0
    %330 = vmatpush2.msra.mxu0 0.0
    %331 = vmatprep.subr.mxu0 0.0
    %332 = vmatpush2.msra.mxu0 0.0
    %333 = vmatprep.subr.mxu0 0.0
    %334 = vmatpush2.msra.mxu0 0.0
    %335 = vmatprep.subr.mxu0 0.0
    %336 = vmatpush2.msra.mxu0 0.0
    %337 = vmatprep.subr.mxu0 0.0
    %338 = vmatpush2.msra.mxu0 0.0
    %339 = vmatprep.subr.mxu0 0.0
    %340 = vmatpush2.msra.mxu0 0.0
    %341 = vmatprep.subr.mxu0 0.0
    %342 = vmatpush2.msra.mxu0 0.0
    %343 = vmatprep.subr.mxu0 0.0
    %344 = vmatpush2.msra.mxu0 0.0
    %345 = vmatprep.subr.mxu0 0.0
    %346 = vmatpush2.msra.mxu0 0.0
    %347 = vmatprep.subr.mxu0 0.0
    %348 = vmatpush2.msra.mxu0 0.0
    %349 = vmatprep.mubr.f32.mxu0 0.0
    %350 = vmatmul.mubr.f32.gmra.mxu0 %v277
    %v351 = vpop.f32.mrf.mxu0
    %v352 = vadd.f32 %v270, %v351
    %v353 = vpop.f32.mrf.mxu0
    %354 = vmatprep.mubr.f32.mxu0 0.0
    %355 = vmatmul.mubr.f32.gmra.mxu0 %v280
    %v356 = vpop.f32.mrf.mxu0
    %v357 = vadd.f32 %v274, %v356
    %v358 = vpop.f32.mrf.mxu0
    %359 = vdwg.mxu0
    %v360 = vtanh.pop %v352
    %v361 = vtanh.pop %v357
    %363 = vset.pattern.permute.xlu0 22
    %364 = vperm.xlu0 %363, %v35
    %v365 = vpop.permute.xlu0 %364
    %v368 = vsel %vm88, %v34, 0
    %v371 = vsel %vm93, %v361, 0
    %373 = vmatprep.subr.mxu0 0.0
    %374 = vmatpush1.msra.mxu0 0.0
    %375 = vmatprep.subr.mxu0 0.0
    %376 = vmatpush1.msra.mxu0 0.0
    %377 = vmatprep.subr.mxu0 0.0
    %378 = vmatpush1.msra.mxu0 0.0
    %379 = vmatprep.subr.mxu0 0.0
    %380 = vmatpush1.msra.mxu0 0.0
    %381 = vmatprep.subr.mxu0 0.0
    %382 = vmatpush1.msra.mxu0 0.0
    %383 = vmatprep.subr.mxu0 0.0
    %384 = vmatpush1.msra.mxu0 0.0
    %385 = vmatprep.subr.mxu0 0.0
    %386 = vmatpush1.msra.mxu0 0.0
    %387 = vmatprep.subr.mxu0 0.0
    %388 = vmatpush1.msra.mxu0 0.0
    %389 = vmatprep.subr.mxu0 0.0
    %390 = vmatpush1.msra.mxu0 0.0
    %391 = vmatprep.subr.mxu0 0.0
    %392 = vmatpush1.msra.mxu0 0.0
    %393 = vmatprep.subr.mxu0 0.0
    %394 = vmatpush1.msra.mxu0 0.0
    %395 = vmatprep.subr.mxu0 0.0
    %396 = vmatpush1.msra.mxu0 0.0
    %397 = vmatprep.subr.mxu0 0.0
    %398 = vmatpush1.msra.mxu0 0.0
    %399 = vmatprep.subr.mxu0 0.0
    %400 = vmatpush1.msra.mxu0 0.0
    %401 = vmatprep.subr.mxu0 0.0
    %402 = vmatpush1.msra.mxu0 %v371
    %403 = vmatprep.subr.mxu0 0.0
    %404 = vmatpush1.msra.mxu0 %v360
    %405 = vmatprep.subr.mxu0 0.0
    %406 = vmatpush2.msra.mxu0 0.0
    %407 = vmatprep.subr.mxu0 0.0
    %408 = vmatpush2.msra.mxu0 0.0
    %409 = vmatprep.subr.mxu0 0.0
    %410 = vmatpush2.msra.mxu0 0.0
    %411 = vmatprep.subr.mxu0 0.0
    %412 = vmatpush2.msra.mxu0 0.0
    %413 = vmatprep.subr.mxu0 0.0
    %414 = vmatpush2.msra.mxu0 0.0
    %415 = vmatprep.subr.mxu0 0.0
    %416 = vmatpush2.msra.mxu0 0.0
    %417 = vmatprep.subr.mxu0 0.0
    %418 = vmatpush2.msra.mxu0 0.0
    %419 = vmatprep.subr.mxu0 0.0
    %420 = vmatpush2.msra.mxu0 0.0
    %421 = vmatprep.subr.mxu0 0.0
    %422 = vmatpush2.msra.mxu0 0.0
    %423 = vmatprep.subr.mxu0 0.0
    %424 = vmatpush2.msra.mxu0 0.0
    %425 = vmatprep.subr.mxu0 0.0
    %426 = vmatpush2.msra.mxu0 0.0
    %427 = vmatprep.subr.mxu0 0.0
    %428 = vmatpush2.msra.mxu0 0.0
    %429 = vmatprep.subr.mxu0 0.0
    %430 = vmatpush2.msra.mxu0 0.0
    %431 = vmatprep.subr.mxu0 0.0
    %432 = vmatpush2.msra.mxu0 0.0
    %433 = vmatprep.subr.mxu0 0.0
    %434 = vmatpush2.msra.mxu0 0.0
    %435 = vmatprep.subr.mxu0 0.0
    %436 = vmatpush2.msra.mxu0 0.0
    %437 = vmatprep.mubr.f32.mxu0 0.0
    %438 = vmatmul.mubr.f32.gmra.mxu0 %v368
    %v439 = vpop.f32.mrf.mxu0
    %v440 = vadd.f32 %v365, %v439
    %v441 = vpop.f32.mrf.mxu0
    %442 = vdwg.mxu0
    %443 = vst [vmem:[#allocation5] sm:$0x3] %v440
    // Predicated region
    $region14: #{ae_forward_lane_dense.1} parent=1 // pred_check
      _
    $region15: #{ae_forward_lane_dense.1} parent=1 // pred_check_branch
      %445 = sbr.rel (0) target = $region17
    $region16: #{ae_forward_lane_dense.1} parent=1 // pred_region
      %s447 = ssub.s32 32, 32
      %448 = vsyncadd [#allocation4], %s447
      %s450 = sshll.u32 [#allocation5], 4
      %s451 = int_to_ptr.vmem [resolvable:$true] %s450
      %453 = dma.vmem_to_hbm [thread:$0]  %s451, 32, %s2, [#allocation4]
    $region17: #{ae_forward_lane_dense.1} parent=1 // pred_fallthru
      _
    // Predicated region
    $region18: #{ae_forward_lane_dense.1} parent=1 // pred_check
      _
    $region19: #{ae_forward_lane_dense.1} parent=1 // pred_check_branch
      %455 = sbr.rel (0) target = $region21
    $region20: #{ae_forward_lane_dense.1} parent=1 // pred_region
      %456 = dma.done [#allocation4], 32
    $region21: #{ae_forward_lane_dense.1} parent=1 // pred_fallthru
      _
    %457 = vsyncpa [#allocation3], 1
    %458 = vsyncpa [#allocation4], 1

</llo_original>
